<compile_context>
chip_gen: v7x
topology: tpu7x:2x2x1
jax: 0.10.0
libtpu: 0.0.40
codegen_flags: <defaults>
</compile_context>

<pallas_src>
import jax
import jax.numpy as jnp
from jax.experimental import pallas as pl
from jax.experimental.pallas import tpu as pltpu

N_IN = 4
HIDDEN = 128
N_OUT = 3


def _silu(z):
    # SiLU(z) = z * sigmoid(z); sigmoid lowers to the EUP (exp/recip slot).
    return z * jax.nn.sigmoid(z)


def mlp_kernel(x_ref,
               w1_ref, b1_ref,
               w2_ref, b2_ref,
               w3_ref, b3_ref,
               w4_ref, b4_ref,
               o_ref):
    x = x_ref[...]                      # (TB, 4) f32
    w1 = w1_ref[...]                    # (4, 128) f32

    # Layer 1: K=4 -> 4 VPU broadcast-FMAs instead of an MXU weight push.
    h = b1_ref[...] + x[:, 0:1] * w1[0:1, :]
    for k in range(1, N_IN):
        h = h + x[:, k:k + 1] * w1[k:k + 1, :]
    h = _silu(h)                        # (TB, 128) f32

    # Layers 2-4: bf16 inputs on the MXU, f32 accumulate, f32 epilogue.
    h = _silu(jnp.dot(h.astype(jnp.bfloat16), w2_ref[...],
                      preferred_element_type=jnp.float32) + b2_ref[...])
    h = _silu(jnp.dot(h.astype(jnp.bfloat16), w3_ref[...],
                      preferred_element_type=jnp.float32) + b3_ref[...])
    h = _silu(jnp.dot(h.astype(jnp.bfloat16), w4_ref[...],
                      preferred_element_type=jnp.float32) + b4_ref[...])

    o_ref[...] = h.astype(o_ref.dtype)  # lane-dense (TB, 128) store


def _round_up(a, m):
    return ((a + m - 1) // m) * m


def mlp_condensed(x, params, *, tb=1024):
    """x: [B, 4] float32. params: dict of (w1,b1,...,w4,b4), weights as [in,out]."""
    B = x.shape[0]
    assert x.shape[1] == N_IN

    # Cast / pad the resident constants ONCE in the wrapper (not per grid step).
    w1 = params["w1"].astype(jnp.float32)                 # (4, 128), VPU path
    b1 = params["b1"].astype(jnp.float32)                 # (1, 128)
    w2 = params["w2"].astype(jnp.bfloat16)                # (128, 128), MXU
    b2 = params["b2"].astype(jnp.float32)
    w3 = params["w3"].astype(jnp.bfloat16)
    b3 = params["b3"].astype(jnp.float32)
    # Lane-densify the output layer: pad 3 -> 128 columns with zeros.
    w4 = (jnp.zeros((HIDDEN, HIDDEN), jnp.float32)
          .at[:, :N_OUT].set(params["w4"]).astype(jnp.bfloat16))
    b4 = jnp.zeros((1, HIDDEN), jnp.float32).at[:, :N_OUT].set(params["b4"])

    # Tile the batch; pad B up to a whole number of tiles (multiple of 8 rows).
    tb = min(tb, _round_up(max(B, 1), 8))
    B_pad = _round_up(B, tb)
    if B_pad != B:
        x = jnp.pad(x, ((0, B_pad - B), (0, 0)))
    grid = (B_pad // tb,)

    def resident(shape):
        # Same block every grid step -> fetched once, stays in VMEM.
        return pl.BlockSpec(shape, lambda i: (0,) * len(shape))

    out = pl.pallas_call(
        mlp_kernel,
        out_shape=jax.ShapeDtypeStruct((B_pad, HIDDEN), jnp.float32),
        grid_spec=pltpu.PrefetchScalarGridSpec(
            num_scalar_prefetch=0,
            grid=grid,
            in_specs=[
                pl.BlockSpec((tb, N_IN), lambda i: (i, 0)),
                resident(w1.shape), resident(b1.shape),
                resident(w2.shape), resident(b2.shape),
                resident(w3.shape), resident(b3.shape),
                resident(w4.shape), resident(b4.shape),
            ],
            out_specs=pl.BlockSpec((tb, HIDDEN), lambda i: (i, 0)),
        ),
        compiler_params=pltpu.CompilerParams(
            dimension_semantics=("parallel",)),
    )(x, w1, b1, w2, b2, w3, b3, w4, b4)

    return out[:B, :N_OUT]


def init_params(key):
    """Deterministic init matching nn.Linear shapes (weights stored as [in, out])."""
    dims = [(N_IN, HIDDEN), (HIDDEN, HIDDEN), (HIDDEN, HIDDEN), (HIDDEN, N_OUT)]
    params = {}
    for idx, (fan_in, fan_out) in enumerate(dims, start=1):
        key, kw, kb = jax.random.split(key, 3)
        bound = 1.0 / jnp.sqrt(fan_in)   # PyTorch nn.Linear default U(-1/sqrt(in), 1/sqrt(in))
        params[f"w{idx}"] = jax.random.uniform(
            kw, (fan_in, fan_out), jnp.float32, -bound, bound)
        params[f"b{idx}"] = jax.random.uniform(
            kb, (1, fan_out), jnp.float32, -bound, bound)
    return params


def mlp_reference_f32(x, params):
    """Pure-JAX f32 reference (exact module semantics)."""
    h = x
    for i in range(1, 5):
        h = h @ params[f"w{i}"] + params[f"b{i}"]
        h = h * jax.nn.sigmoid(h)
    return h


if __name__ == "__main__":
    key = jax.random.PRNGKey(0)
    kx, kp = jax.random.split(key)
    params = init_params(kp)

    ok = True
    for B in (8, 37):   # 37 exercises the partial-tile padding path
        xk = jax.random.fold_in(kx, B)
        x = jax.random.normal(xk, (B, N_IN), jnp.float32)

        out = jax.block_until_ready(mlp_condensed(x, params))
        ref = mlp_reference_f32(x, params)

        assert out.shape == (B, N_OUT)
        # bf16 MXU matmuls -> loose tolerance vs the f32 reference.
        ok &= bool(jnp.allclose(out, ref, atol=3e-2, rtol=3e-2))

    assert ok, "mismatch vs reference"
    print("KERNEL_OK")
</pallas_src>

<mosaic_0001>
module attributes {stable_mosaic.version = 11 : i64} {
  func.func @mlp_kernel(%arg0: i32, %arg1: memref<8x4xf32, #tpu.memory_space<vmem>>, %arg2: memref<4x128xf32, #tpu.memory_space<vmem>>, %arg3: memref<1x128xf32, #tpu.memory_space<vmem>>, %arg4: memref<128x128xbf16, #tpu.memory_space<vmem>>, %arg5: memref<1x128xf32, #tpu.memory_space<vmem>>, %arg6: memref<128x128xbf16, #tpu.memory_space<vmem>>, %arg7: memref<1x128xf32, #tpu.memory_space<vmem>>, %arg8: memref<128x128xbf16, #tpu.memory_space<vmem>>, %arg9: memref<1x128xf32, #tpu.memory_space<vmem>>, %arg10: memref<8x128xf32, #tpu.memory_space<vmem>>) attributes {dimension_semantics = [#tpu.dimension_semantics<parallel>], iteration_bounds = array<i64: 1>, scalar_prefetch = 0 : i64, scratch_operands = 0 : i64, tpu.core_type = #tpu.core_type<tc>, window_params = [{transform_indices = @transform_0, window_bounds = array<i64: 8, 4>}, {pipeline_mode = #tpu.pipeline_mode<synchronous>, transform_indices = @transform_1, window_bounds = array<i64: 4, 128>}, {pipeline_mode = #tpu.pipeline_mode<synchronous>, transform_indices = @transform_2, window_bounds = array<i64: 1, 128>}, {pipeline_mode = #tpu.pipeline_mode<synchronous>, transform_indices = @transform_3, window_bounds = array<i64: 128, 128>}, {pipeline_mode = #tpu.pipeline_mode<synchronous>, transform_indices = @transform_4, window_bounds = array<i64: 1, 128>}, {pipeline_mode = #tpu.pipeline_mode<synchronous>, transform_indices = @transform_5, window_bounds = array<i64: 128, 128>}, {pipeline_mode = #tpu.pipeline_mode<synchronous>, transform_indices = @transform_6, window_bounds = array<i64: 1, 128>}, {pipeline_mode = #tpu.pipeline_mode<synchronous>, transform_indices = @transform_7, window_bounds = array<i64: 128, 128>}, {pipeline_mode = #tpu.pipeline_mode<synchronous>, transform_indices = @transform_8, window_bounds = array<i64: 1, 128>}, {transform_indices = @transform_9, window_bounds = array<i64: 8, 128>}]} {
    %c0 = arith.constant 0 : index
    %c0_0 = arith.constant 0 : index
    %0 = vector.load %arg1[%c0, %c0_0] : memref<8x4xf32, #tpu.memory_space<vmem>>, vector<8x4xf32>
    %c0_1 = arith.constant 0 : index
    %c0_2 = arith.constant 0 : index
    %1 = vector.load %arg2[%c0_1, %c0_2] : memref<4x128xf32, #tpu.memory_space<vmem>>, vector<4x128xf32>
    %c0_3 = arith.constant 0 : index
    %c0_4 = arith.constant 0 : index
    %2 = vector.load %arg3[%c0_3, %c0_4] : memref<1x128xf32, #tpu.memory_space<vmem>>, vector<1x128xf32>
    %3 = vector.extract_strided_slice %0 {offsets = [0, 0], sizes = [8, 1], strides = [1, 1]} : vector<8x4xf32> to vector<8x1xf32>
    %4 = vector.extract_strided_slice %1 {offsets = [0, 0], sizes = [1, 128], strides = [1, 1]} : vector<4x128xf32> to vector<1x128xf32>
    %5 = vector.broadcast %3 : vector<8x1xf32> to vector<8x128xf32>
    %6 = vector.broadcast %4 : vector<1x128xf32> to vector<8x128xf32>
    %7 = arith.mulf %5, %6 : vector<8x128xf32>
    %8 = vector.broadcast %2 : vector<1x128xf32> to vector<8x128xf32>
    %9 = arith.addf %8, %7 : vector<8x128xf32>
    %10 = vector.extract_strided_slice %0 {offsets = [0, 1], sizes = [8, 1], strides = [1, 1]} : vector<8x4xf32> to vector<8x1xf32>
    %11 = vector.extract_strided_slice %1 {offsets = [1, 0], sizes = [1, 128], strides = [1, 1]} : vector<4x128xf32> to vector<1x128xf32>
    %12 = vector.broadcast %10 : vector<8x1xf32> to vector<8x128xf32>
    %13 = vector.broadcast %11 : vector<1x128xf32> to vector<8x128xf32>
    %14 = arith.mulf %12, %13 : vector<8x128xf32>
    %15 = arith.addf %9, %14 : vector<8x128xf32>
    %16 = vector.extract_strided_slice %0 {offsets = [0, 2], sizes = [8, 1], strides = [1, 1]} : vector<8x4xf32> to vector<8x1xf32>
    %17 = vector.extract_strided_slice %1 {offsets = [2, 0], sizes = [1, 128], strides = [1, 1]} : vector<4x128xf32> to vector<1x128xf32>
    %18 = vector.broadcast %16 : vector<8x1xf32> to vector<8x128xf32>
    %19 = vector.broadcast %17 : vector<1x128xf32> to vector<8x128xf32>
    %20 = arith.mulf %18, %19 : vector<8x128xf32>
    %21 = arith.addf %15, %20 : vector<8x128xf32>
    %22 = vector.extract_strided_slice %0 {offsets = [0, 3], sizes = [8, 1], strides = [1, 1]} : vector<8x4xf32> to vector<8x1xf32>
    %23 = vector.extract_strided_slice %1 {offsets = [3, 0], sizes = [1, 128], strides = [1, 1]} : vector<4x128xf32> to vector<1x128xf32>
    %24 = vector.broadcast %22 : vector<8x1xf32> to vector<8x128xf32>
    %25 = vector.broadcast %23 : vector<1x128xf32> to vector<8x128xf32>
    %26 = arith.mulf %24, %25 : vector<8x128xf32>
    %27 = arith.addf %21, %26 : vector<8x128xf32>
    %28 = arith.negf %27 : vector<8x128xf32>
    %29 = math.exp %28 : vector<8x128xf32>
    %cst = arith.constant 1.000000e+00 : f32
    %30 = vector.broadcast %cst : f32 to vector<8x128xf32>
    %31 = arith.addf %30, %29 : vector<8x128xf32>
    %32 = arith.divf %30, %31 : vector<8x128xf32>
    %33 = arith.mulf %27, %32 : vector<8x128xf32>
    %34 = arith.truncf %33 : vector<8x128xf32> to vector<8x128xbf16>
    %c0_5 = arith.constant 0 : index
    %c0_6 = arith.constant 0 : index
    %35 = vector.load %arg4[%c0_5, %c0_6] : memref<128x128xbf16, #tpu.memory_space<vmem>>, vector<128x128xbf16>
    %cst_7 = arith.constant dense<0.000000e+00> : vector<8x128xf32>
    %36 = tpu.matmul %34, %35, %cst_7 {dimension_numbers = #tpu.dot_dimension_numbers<[1], [0], [0], [1], [0, 0, 1, 1], [], []>} : vector<8x128xbf16>, vector<128x128xbf16>, vector<8x128xf32> -> vector<8x128xf32>
    %c0_8 = arith.constant 0 : index
    %c0_9 = arith.constant 0 : index
    %37 = vector.load %arg5[%c0_8, %c0_9] : memref<1x128xf32, #tpu.memory_space<vmem>>, vector<1x128xf32>
    %38 = vector.broadcast %37 : vector<1x128xf32> to vector<8x128xf32>
    %39 = arith.addf %36, %38 : vector<8x128xf32>
    %40 = arith.negf %39 : vector<8x128xf32>
    %41 = math.exp %40 : vector<8x128xf32>
    %cst_10 = arith.constant 1.000000e+00 : f32
    %42 = vector.broadcast %cst_10 : f32 to vector<8x128xf32>
    %43 = arith.addf %42, %41 : vector<8x128xf32>
    %44 = arith.divf %42, %43 : vector<8x128xf32>
    %45 = arith.mulf %39, %44 : vector<8x128xf32>
    %46 = arith.truncf %45 : vector<8x128xf32> to vector<8x128xbf16>
    %c0_11 = arith.constant 0 : index
    %c0_12 = arith.constant 0 : index
    %47 = vector.load %arg6[%c0_11, %c0_12] : memref<128x128xbf16, #tpu.memory_space<vmem>>, vector<128x128xbf16>
    %cst_13 = arith.constant dense<0.000000e+00> : vector<8x128xf32>
    %48 = tpu.matmul %46, %47, %cst_13 {dimension_numbers = #tpu.dot_dimension_numbers<[1], [0], [0], [1], [0, 0, 1, 1], [], []>} : vector<8x128xbf16>, vector<128x128xbf16>, vector<8x128xf32> -> vector<8x128xf32>
    %c0_14 = arith.constant 0 : index
    %c0_15 = arith.constant 0 : index
    %49 = vector.load %arg7[%c0_14, %c0_15] : memref<1x128xf32, #tpu.memory_space<vmem>>, vector<1x128xf32>
    %50 = vector.broadcast %49 : vector<1x128xf32> to vector<8x128xf32>
    %51 = arith.addf %48, %50 : vector<8x128xf32>
    %52 = arith.negf %51 : vector<8x128xf32>
    %53 = math.exp %52 : vector<8x128xf32>
    %cst_16 = arith.constant 1.000000e+00 : f32
    %54 = vector.broadcast %cst_16 : f32 to vector<8x128xf32>
    %55 = arith.addf %54, %53 : vector<8x128xf32>
    %56 = arith.divf %54, %55 : vector<8x128xf32>
    %57 = arith.mulf %51, %56 : vector<8x128xf32>
    %58 = arith.truncf %57 : vector<8x128xf32> to vector<8x128xbf16>
    %c0_17 = arith.constant 0 : index
    %c0_18 = arith.constant 0 : index
    %59 = vector.load %arg8[%c0_17, %c0_18] : memref<128x128xbf16, #tpu.memory_space<vmem>>, vector<128x128xbf16>
    %cst_19 = arith.constant dense<0.000000e+00> : vector<8x128xf32>
    %60 = tpu.matmul %58, %59, %cst_19 {dimension_numbers = #tpu.dot_dimension_numbers<[1], [0], [0], [1], [0, 0, 1, 1], [], []>} : vector<8x128xbf16>, vector<128x128xbf16>, vector<8x128xf32> -> vector<8x128xf32>
    %c0_20 = arith.constant 0 : index
    %c0_21 = arith.constant 0 : index
    %61 = vector.load %arg9[%c0_20, %c0_21] : memref<1x128xf32, #tpu.memory_space<vmem>>, vector<1x128xf32>
    %62 = vector.broadcast %61 : vector<1x128xf32> to vector<8x128xf32>
    %63 = arith.addf %60, %62 : vector<8x128xf32>
    %64 = arith.negf %63 : vector<8x128xf32>
    %65 = math.exp %64 : vector<8x128xf32>
    %cst_22 = arith.constant 1.000000e+00 : f32
    %66 = vector.broadcast %cst_22 : f32 to vector<8x128xf32>
    %67 = arith.addf %66, %65 : vector<8x128xf32>
    %68 = arith.divf %66, %67 : vector<8x128xf32>
    %69 = arith.mulf %63, %68 : vector<8x128xf32>
    %c0_23 = arith.constant 0 : index
    %c0_24 = arith.constant 0 : index
    %70 = vector.load %arg10[%c0_23, %c0_24] : memref<8x128xf32, #tpu.memory_space<vmem>>, vector<8x128xf32>
    tpu.vector_store %arg10[%c0_23, %c0_24], %69 {strides = array<i32>} : memref<8x128xf32, #tpu.memory_space<vmem>>, vector<8x128xf32>,
    return
  }
  func.func @transform_0(%arg0: i32) -> (i32, i32) {
    %c0_i32 = arith.constant 0 : i32
    %c0_i32_0 = arith.constant 0 : i32
    return %arg0, %c0_i32 : i32, i32
  }
  func.func @transform_1(%arg0: i32) -> (i32, i32) {
    %c0_i32 = arith.constant 0 : i32
    %c0_i32_0 = arith.constant 0 : i32
    %c0_i32_1 = arith.constant 0 : i32
    return %c0_i32, %c0_i32_0 : i32, i32
  }
  func.func @transform_2(%arg0: i32) -> (i32, i32) {
    %c0_i32 = arith.constant 0 : i32
    %c0_i32_0 = arith.constant 0 : i32
    %c0_i32_1 = arith.constant 0 : i32
    return %c0_i32, %c0_i32_0 : i32, i32
  }
  func.func @transform_3(%arg0: i32) -> (i32, i32) {
    %c0_i32 = arith.constant 0 : i32
    %c0_i32_0 = arith.constant 0 : i32
    %c0_i32_1 = arith.constant 0 : i32
    return %c0_i32, %c0_i32_0 : i32, i32
  }
  func.func @transform_4(%arg0: i32) -> (i32, i32) {
    %c0_i32 = arith.constant 0 : i32
    %c0_i32_0 = arith.constant 0 : i32
    %c0_i32_1 = arith.constant 0 : i32
    return %c0_i32, %c0_i32_0 : i32, i32
  }
  func.func @transform_5(%arg0: i32) -> (i32, i32) {
    %c0_i32 = arith.constant 0 : i32
    %c0_i32_0 = arith.constant 0 : i32
    %c0_i32_1 = arith.constant 0 : i32
    return %c0_i32, %c0_i32_0 : i32, i32
  }
  func.func @transform_6(%arg0: i32) -> (i32, i32) {
    %c0_i32 = arith.constant 0 : i32
    %c0_i32_0 = arith.constant 0 : i32
    %c0_i32_1 = arith.constant 0 : i32
    return %c0_i32, %c0_i32_0 : i32, i32
  }
  func.func @transform_7(%arg0: i32) -> (i32, i32) {
    %c0_i32 = arith.constant 0 : i32
    %c0_i32_0 = arith.constant 0 : i32
    %c0_i32_1 = arith.constant 0 : i32
    return %c0_i32, %c0_i32_0 : i32, i32
  }
  func.func @transform_8(%arg0: i32) -> (i32, i32) {
    %c0_i32 = arith.constant 0 : i32
    %c0_i32_0 = arith.constant 0 : i32
    %c0_i32_1 = arith.constant 0 : i32
    return %c0_i32, %c0_i32_0 : i32, i32
  }
  func.func @transform_9(%arg0: i32) -> (i32, i32) {
    %c0_i32 = arith.constant 0 : i32
    %c0_i32_0 = arith.constant 0 : i32
    return %arg0, %c0_i32 : i32, i32
  }
}

</mosaic_0001>

<llo_original>
// kernel: tpu_custom_call.1
$region0: #{tpu_custom_call.1}
  #allocation0 [shape = 'u32[]', space=smem, size = 0x4, offset = 0x4, fixed_abs, tag = 'smem constant byte address 0x4 - core index']
  #allocation1 [shape = 'u32[144,128]{1,0:T(1,128)}', space=vmem, size = 0x12000, scoped, tag = 'internal scratch']
  %s0 = inlined_call_operand.vmem [shape: f32[8,4], index: 0, kind: input, shape index: {}]
  %s1 = inlined_call_operand.vmem [shape: f32[4,128], index: 1, kind: input, shape index: {}]
  %s2 = inlined_call_operand.vmem [shape: f32[1,128], index: 2, kind: input, shape index: {}]
  %s3 = inlined_call_operand.hbm [shape: bf16[128,128], index: 3, kind: input, shape index: {}]
  %s4 = inlined_call_operand.vmem [shape: f32[1,128], index: 4, kind: input, shape index: {}]
  %s5 = inlined_call_operand.hbm [shape: bf16[128,128], index: 5, kind: input, shape index: {}]
  %s6 = inlined_call_operand.vmem [shape: f32[1,128], index: 6, kind: input, shape index: {}]
  %s7 = inlined_call_operand.hbm [shape: bf16[128,128], index: 7, kind: input, shape index: {}]
  %s8 = inlined_call_operand.vmem [shape: f32[1,128], index: 8, kind: input, shape index: {}]
  %s9 = inlined_call_operand.hbm [shape: f32[8,128], index: 9, kind: output, shape index: {}]
  %s10 = sld [smem:[#allocation0]]
  $region58: #{tpu_custom_call.1} parent=0
    _
  %s12 = ssub.s32 1, %s10
  %s13 = scalar_select 0, %s12, %s10
  $region1: #{tpu_custom_call.1} parent=0
    #allocation2 [shape = 'u8[32768]{0}', space=vmem, size = 0x8000, scoped, tag = 'input window, operand 3, single buffered']
    #allocation3 [shape = 's32[1]{0}', space=sflag, size = 0x4, scoped, tag = 'scoped memory for tpu_custom_call.1']
    #allocation4 [shape = 's32[1]{0}', space=sflag, size = 0x4, scoped, tag = 'scoped memory for tpu_custom_call.1']
    #allocation5 [shape = 'u8[32768]{0}', space=vmem, size = 0x8000, scoped, tag = 'input window, operand 5, single buffered']
    #allocation6 [shape = 's32[1]{0}', space=sflag, size = 0x4, scoped, tag = 'scoped memory for tpu_custom_call.1']
    #allocation7 [shape = 'u8[32768]{0}', space=vmem, size = 0x8000, scoped, tag = 'input window, operand 7, single buffered']
    #allocation8 [shape = 'u8[4096]{0}', space=vmem, size = 0x1000, scoped, tag = 'output window, operand 0, single buffered']
    %14 = vsyncpa [#allocation3], 0
    %15 = vsyncpa [#allocation6], 0
    %16 = vsyncpa [#allocation4], 0
    // Predicated region
    $region2: #{tpu_custom_call.1} parent=1 // pred_check
      _
    $region3: #{tpu_custom_call.1} parent=1 // pred_check_branch
      %18 = sbr.rel (0) target = $region5
    $region4: #{tpu_custom_call.1} parent=1 // pred_region
      _
    $region5: #{tpu_custom_call.1} parent=1 // pred_fallthru
      _
    // Predicated region
    $region6: #{tpu_custom_call.1} parent=1 // pred_check
      _
    $region7: #{tpu_custom_call.1} parent=1 // pred_check_branch
      %20 = sbr.rel (0) target = $region9
    $region8: #{tpu_custom_call.1} parent=1 // pred_region
      _
    $region9: #{tpu_custom_call.1} parent=1 // pred_fallthru
      _
    // Predicated region
    $region10: #{tpu_custom_call.1} parent=1 // pred_check
      _
    $region11: #{tpu_custom_call.1} parent=1 // pred_check_branch
      %22 = sbr.rel (0) target = $region13
    $region12: #{tpu_custom_call.1} parent=1 // pred_region
      _
    $region13: #{tpu_custom_call.1} parent=1 // pred_fallthru
      _
    // Predicated region
    $region14: #{tpu_custom_call.1} parent=1 // pred_check
      _
    $region15: #{tpu_custom_call.1} parent=1 // pred_check_branch
      %24 = sbr.rel (0) target = $region17
    $region16: #{tpu_custom_call.1} parent=1 // pred_region
      %s26 = ssub.s32 1024, 1024
      %27 = vsyncadd [#allocation3], %s26
      %s28 = sshll.u32 [#allocation2], 4
      %s29 = int_to_ptr.vmem [resolvable:$true] %s28
      %34 = dma.hbm_to_vmem [thread:$0]  %s3, 1024, %s29, [#allocation3], 64, 64, 4
    $region17: #{tpu_custom_call.1} parent=1 // pred_fallthru
      _
    // Predicated region
    $region18: #{tpu_custom_call.1} parent=1 // pred_check
      _
    $region19: #{tpu_custom_call.1} parent=1 // pred_check_branch
      %36 = sbr.rel (0) target = $region21
    $region20: #{tpu_custom_call.1} parent=1 // pred_region
      _
    $region21: #{tpu_custom_call.1} parent=1 // pred_fallthru
      _
    // Predicated region
    $region22: #{tpu_custom_call.1} parent=1 // pred_check
      _
    $region23: #{tpu_custom_call.1} parent=1 // pred_check_branch
      %38 = sbr.rel (0) target = $region25
    $region24: #{tpu_custom_call.1} parent=1 // pred_region
      %s40 = ssub.s32 1024, 1024
      %41 = vsyncadd [#allocation6], %s40
      %s42 = sshll.u32 [#allocation5], 4
      %s43 = int_to_ptr.vmem [resolvable:$true] %s42
      %48 = dma.hbm_to_vmem [thread:$0]  %s5, 1024, %s43, [#allocation6], 64, 64, 4
    $region25: #{tpu_custom_call.1} parent=1 // pred_fallthru
      _
    // Predicated region
    $region26: #{tpu_custom_call.1} parent=1 // pred_check
      _
    $region27: #{tpu_custom_call.1} parent=1 // pred_check_branch
      %50 = sbr.rel (0) target = $region29
    $region28: #{tpu_custom_call.1} parent=1 // pred_region
      _
    $region29: #{tpu_custom_call.1} parent=1 // pred_fallthru
      _
    // Predicated region
    $region30: #{tpu_custom_call.1} parent=1 // pred_check
      _
    $region31: #{tpu_custom_call.1} parent=1 // pred_check_branch
      %52 = sbr.rel (0) target = $region33
    $region32: #{tpu_custom_call.1} parent=1 // pred_region
      %s54 = ssub.s32 1024, 1024
      %55 = vsyncadd [#allocation6], %s54
      %s56 = sshll.u32 [#allocation7], 4
      %s57 = int_to_ptr.vmem [resolvable:$true] %s56
      %62 = dma.hbm_to_vmem [thread:$0]  %s7, 1024, %s57, [#allocation6], 64, 64, 4
    $region33: #{tpu_custom_call.1} parent=1 // pred_fallthru
      _
    // Predicated region
    $region34: #{tpu_custom_call.1} parent=1 // pred_check
      _
    $region35: #{tpu_custom_call.1} parent=1 // pred_check_branch
      %64 = sbr.rel (0) target = $region37
    $region36: #{tpu_custom_call.1} parent=1 // pred_region
      _
    $region37: #{tpu_custom_call.1} parent=1 // pred_fallthru
      _
    // Predicated region
    $region38: #{tpu_custom_call.1} parent=1 // pred_check
      _
    $region39: #{tpu_custom_call.1} parent=1 // pred_check_branch
      %66 = sbr.rel (0) target = $region41
    $region40: #{tpu_custom_call.1} parent=1 // pred_region
      %67 = dma.done [#allocation3], 1024
    $region41: #{tpu_custom_call.1} parent=1 // pred_fallthru
      _
    // Predicated region
    $region42: #{tpu_custom_call.1} parent=1 // pred_check
      _
    $region43: #{tpu_custom_call.1} parent=1 // pred_check_branch
      %69 = sbr.rel (0) target = $region45
    $region44: #{tpu_custom_call.1} parent=1 // pred_region
      %70 = dma.done [#allocation6], 1024
    $region45: #{tpu_custom_call.1} parent=1 // pred_fallthru
      _
    // Predicated region
    $region46: #{tpu_custom_call.1} parent=1 // pred_check
      _
    $region47: #{tpu_custom_call.1} parent=1 // pred_check_branch
      %72 = sbr.rel (0) target = $region49
    $region48: #{tpu_custom_call.1} parent=1 // pred_region
      %73 = dma.done [#allocation6], 1024
    $region49: #{tpu_custom_call.1} parent=1 // pred_fallthru
      _
    %v75 = vld [vmem:[%s0] sm:$0xff]
    %v76 = vld [vmem:[%s1] sm:$0xf]
    %v77 = vld [vmem:[%s2] sm:$0x1]
    %79 = vset.pattern.permute.xlu0 0
    %80 = vperm.xlu0 %79, %v75
    %v81 = vpop.permute.xlu0 %80
    %v83 = vlaneseq
    %v84 = vshrl.u32 %v83, 7
    %v85 = vsub.s32 0, %v84
    %v86 = vrot.slane %v76, %v85
    %v87 = vmul.f32 %v81, %v86
    %v89 = vlaneseq
    %v90 = vshrl.u32 %v89, 7
    %v91 = vsub.s32 0, %v90
    %v92 = vrot.slane %v77, %v91
    %v94 = vadd.f32 %v92, %v87
    %95 = vset.pattern.permute.xlu0 1
    %96 = vperm.xlu0 %95, %v75
    %v97 = vpop.permute.xlu0 %96
    %v99 = vlaneseq
    %v100 = vshrl.u32 %v99, 7
    %v101 = vsub.s32 1, %v100
    %v102 = vrot.slane %v76, %v101
    %v103 = vmul.f32 %v97, %v102
    %v104 = vadd.f32 %v94, %v103
    %105 = vset.pattern.permute.xlu0 2
    %106 = vperm.xlu0 %105, %v75
    %v107 = vpop.permute.xlu0 %106
    %v109 = vlaneseq
    %v110 = vshrl.u32 %v109, 7
    %v111 = vsub.s32 2, %v110
    %v112 = vrot.slane %v76, %v111
    %v113 = vmul.f32 %v107, %v112
    %v114 = vadd.f32 %v104, %v113
    %115 = vset.pattern.permute.xlu0 3
    %116 = vperm.xlu0 %115, %v75
    %v117 = vpop.permute.xlu0 %116
    %v119 = vlaneseq
    %v120 = vshrl.u32 %v119, 7
    %v121 = vsub.s32 3, %v120
    %v122 = vrot.slane %v76, %v121
    %v123 = vmul.f32 %v117, %v122
    %v124 = vadd.f32 %v114, %v123
    %v125 = vxor.u32 %v124, 2147483648
    %v126 = vmul.f32 %v125, 1.442695
    %v127 = vpow.pop %v126
    %v128 = vadd.f32 %v127, 1.0
    %v129 = vrcp.pop %v128
    %v130 = vmul.f32 1.0, %v129
    %v131 = vmul.f32 %v124, %v130
    %v132 = vpack.c.bf16 %v131, %v131
    %v133 = vld [vmem:[#allocation2] sm:$0xf]
    %v134 = vld [vmem:[#allocation2 + $0x4] sm:$0xf]
    %v135 = vld [vmem:[#allocation2 + $0x8] sm:$0xf]
    %v136 = vld [vmem:[#allocation2 + $0xc] sm:$0xf]
    %v137 = vld [vmem:[#allocation2 + $0x10] sm:$0xf]
    %v138 = vld [vmem:[#allocation2 + $0x14] sm:$0xf]
    %v139 = vld [vmem:[#allocation2 + $0x18] sm:$0xf]
    %v140 = vld [vmem:[#allocation2 + $0x1c] sm:$0xf]
    %v141 = vld [vmem:[#allocation2 + $0x20] sm:$0xf]
    %v142 = vld [vmem:[#allocation2 + $0x24] sm:$0xf]
    %v143 = vld [vmem:[#allocation2 + $0x28] sm:$0xf]
    %v144 = vld [vmem:[#allocation2 + $0x2c] sm:$0xf]
    %v145 = vld [vmem:[#allocation2 + $0x30] sm:$0xf]
    %v146 = vld [vmem:[#allocation2 + $0x34] sm:$0xf]
    %v147 = vld [vmem:[#allocation2 + $0x38] sm:$0xf]
    %v148 = vld [vmem:[#allocation2 + $0x3c] sm:$0xf]
    %v149 = vld [vmem:[%s4] sm:$0x1]
    %v151 = vlaneseq
    %v152 = vshrl.u32 %v151, 7
    %v153 = vsub.s32 0, %v152
    %v154 = vrot.slane %v149, %v153
    %v172 = vunpack.c.l.b16 %v133
    %v173 = vunpack.c.l.b16 %v134
    %v174 = vunpack.c.l.b16 %v135
    %v175 = vunpack.c.l.b16 %v136
    %v176 = vunpack.c.l.b16 %v137
    %v177 = vunpack.c.l.b16 %v138
    %v178 = vunpack.c.l.b16 %v139
    %v179 = vunpack.c.l.b16 %v140
    %v180 = vunpack.c.l.b16 %v141
    %v181 = vunpack.c.l.b16 %v142
    %v182 = vunpack.c.l.b16 %v143
    %v183 = vunpack.c.l.b16 %v144
    %v184 = vunpack.c.l.b16 %v145
    %v185 = vunpack.c.l.b16 %v146
    %v186 = vunpack.c.l.b16 %v147
    %v187 = vunpack.c.l.b16 %v148
    %v188 = vpack.c.b16 %v173, %v172
    %v189 = vpack.c.b16 %v175, %v174
    %v190 = vpack.c.b16 %v177, %v176
    %v191 = vpack.c.b16 %v179, %v178
    %v192 = vpack.c.b16 %v181, %v180
    %v193 = vpack.c.b16 %v183, %v182
    %v194 = vpack.c.b16 %v185, %v184
    %v195 = vpack.c.b16 %v187, %v186
    %204 = vmatprep.subr.bf16.mxu0 0
    %205 = vmatpush1.bf16.msra.mxu0 %v188
    %206 = vmatprep.subr.bf16.mxu0 0
    %207 = vmatpush1.bf16.msra.mxu0 %v189
    %208 = vmatprep.subr.bf16.mxu0 0
    %209 = vmatpush1.bf16.msra.mxu0 %v190
    %210 = vmatprep.subr.bf16.mxu0 0
    %211 = vmatpush1.bf16.msra.mxu0 %v191
    %212 = vmatprep.subr.bf16.mxu0 0
    %213 = vmatpush1.bf16.msra.mxu0 %v192
    %214 = vmatprep.subr.bf16.mxu0 0
    %215 = vmatpush1.bf16.msra.mxu0 %v193
    %216 = vmatprep.subr.bf16.mxu0 0
    %217 = vmatpush1.bf16.msra.mxu0 %v194
    %218 = vmatprep.subr.bf16.mxu0 0
    %219 = vmatpush1.bf16.msra.mxu0 %v195
    %220 = vmatprep.subr.bf16.mxu0 0
    %221 = vmatpush1.bf16.msra.mxu0 0
    %222 = vmatprep.subr.bf16.mxu0 0
    %223 = vmatpush1.bf16.msra.mxu0 0
    %224 = vmatprep.subr.bf16.mxu0 0
    %225 = vmatpush1.bf16.msra.mxu0 0
    %226 = vmatprep.subr.bf16.mxu0 0
    %227 = vmatpush1.bf16.msra.mxu0 0
    %228 = vmatprep.subr.bf16.mxu0 0
    %229 = vmatpush1.bf16.msra.mxu0 0
    %230 = vmatprep.subr.bf16.mxu0 0
    %231 = vmatpush1.bf16.msra.mxu0 0
    %232 = vmatprep.subr.bf16.mxu0 0
    %233 = vmatpush1.bf16.msra.mxu0 0
    %234 = vmatprep.subr.bf16.mxu0 0
    %235 = vmatpush1.bf16.msra.mxu0 0
    %236 = vmatprep.mubr.bf16.mxu0 0
    %237 = vmatmul.mubr.bf16.gmra.mrb[0].mxu0 %v132
    %v238 = vpop.f32.mrb[0].mxu0
    %v239 = vadd.f32 %v154, %v238
    %v240 = vpop.f32.mrb[0].mxu0
    %v241 = vpop.f32.mrb[0].mxu0
    %v242 = vpop.f32.mrb[0].mxu0
    %243 = vdwg.mxu0
    %v244 = vxor.u32 %v239, 2147483648
    %v245 = vmul.f32 %v244, 1.442695
    %v246 = vpow.pop %v245
    %v247 = vadd.f32 %v246, 1.0
    %v248 = vrcp.pop %v247
    %v249 = vmul.f32 1.0, %v248
    %v250 = vmul.f32 %v239, %v249
    %v251 = vpack.c.bf16 %v250, %v250
    %v252 = vld [vmem:[#allocation5] sm:$0xf]
    %v253 = vld [vmem:[#allocation5 + $0x4] sm:$0xf]
    %v254 = vld [vmem:[#allocation5 + $0x8] sm:$0xf]
    %v255 = vld [vmem:[#allocation5 + $0xc] sm:$0xf]
    %v256 = vld [vmem:[#allocation5 + $0x10] sm:$0xf]
    %v257 = vld [vmem:[#allocation5 + $0x14] sm:$0xf]
    %v258 = vld [vmem:[#allocation5 + $0x18] sm:$0xf]
    %v259 = vld [vmem:[#allocation5 + $0x1c] sm:$0xf]
    %v260 = vld [vmem:[#allocation5 + $0x20] sm:$0xf]
    %v261 = vld [vmem:[#allocation5 + $0x24] sm:$0xf]
    %v262 = vld [vmem:[#allocation5 + $0x28] sm:$0xf]
    %v263 = vld [vmem:[#allocation5 + $0x2c] sm:$0xf]
    %v264 = vld [vmem:[#allocation5 + $0x30] sm:$0xf]
    %v265 = vld [vmem:[#allocation5 + $0x34] sm:$0xf]
    %v266 = vld [vmem:[#allocation5 + $0x38] sm:$0xf]
    %v267 = vld [vmem:[#allocation5 + $0x3c] sm:$0xf]
    %v268 = vld [vmem:[%s6] sm:$0x1]
    %v270 = vlaneseq
    %v271 = vshrl.u32 %v270, 7
    %v272 = vsub.s32 0, %v271
    %v273 = vrot.slane %v268, %v272
    %v291 = vunpack.c.l.b16 %v252
    %v292 = vunpack.c.l.b16 %v253
    %v293 = vunpack.c.l.b16 %v254
    %v294 = vunpack.c.l.b16 %v255
    %v295 = vunpack.c.l.b16 %v256
    %v296 = vunpack.c.l.b16 %v257
    %v297 = vunpack.c.l.b16 %v258
    %v298 = vunpack.c.l.b16 %v259
    %v299 = vunpack.c.l.b16 %v260
    %v300 = vunpack.c.l.b16 %v261
    %v301 = vunpack.c.l.b16 %v262
    %v302 = vunpack.c.l.b16 %v263
    %v303 = vunpack.c.l.b16 %v264
    %v304 = vunpack.c.l.b16 %v265
    %v305 = vunpack.c.l.b16 %v266
    %v306 = vunpack.c.l.b16 %v267
    %v307 = vpack.c.b16 %v292, %v291
    %v308 = vpack.c.b16 %v294, %v293
    %v309 = vpack.c.b16 %v296, %v295
    %v310 = vpack.c.b16 %v298, %v297
    %v311 = vpack.c.b16 %v300, %v299
    %v312 = vpack.c.b16 %v302, %v301
    %v313 = vpack.c.b16 %v304, %v303
    %v314 = vpack.c.b16 %v306, %v305
    %323 = vmatprep.subr.bf16.mxu0 0
    %324 = vmatpush1.bf16.msra.mxu0 %v307
    %325 = vmatprep.subr.bf16.mxu0 0
    %326 = vmatpush1.bf16.msra.mxu0 %v308
    %327 = vmatprep.subr.bf16.mxu0 0
    %328 = vmatpush1.bf16.msra.mxu0 %v309
    %329 = vmatprep.subr.bf16.mxu0 0
    %330 = vmatpush1.bf16.msra.mxu0 %v310
    %331 = vmatprep.subr.bf16.mxu0 0
    %332 = vmatpush1.bf16.msra.mxu0 %v311
    %333 = vmatprep.subr.bf16.mxu0 0
    %334 = vmatpush1.bf16.msra.mxu0 %v312
    %335 = vmatprep.subr.bf16.mxu0 0
    %336 = vmatpush1.bf16.msra.mxu0 %v313
    %337 = vmatprep.subr.bf16.mxu0 0
    %338 = vmatpush1.bf16.msra.mxu0 %v314
    %339 = vmatprep.subr.bf16.mxu0 0
    %340 = vmatpush1.bf16.msra.mxu0 0
    %341 = vmatprep.subr.bf16.mxu0 0
    %342 = vmatpush1.bf16.msra.mxu0 0
    %343 = vmatprep.subr.bf16.mxu0 0
    %344 = vmatpush1.bf16.msra.mxu0 0
    %345 = vmatprep.subr.bf16.mxu0 0
    %346 = vmatpush1.bf16.msra.mxu0 0
    %347 = vmatprep.subr.bf16.mxu0 0
    %348 = vmatpush1.bf16.msra.mxu0 0
    %349 = vmatprep.subr.bf16.mxu0 0
    %350 = vmatpush1.bf16.msra.mxu0 0
    %351 = vmatprep.subr.bf16.mxu0 0
    %352 = vmatpush1.bf16.msra.mxu0 0
    %353 = vmatprep.subr.bf16.mxu0 0
    %354 = vmatpush1.bf16.msra.mxu0 0
    %355 = vmatprep.mubr.bf16.mxu0 0
    %356 = vmatmul.mubr.bf16.gmra.mrb[0].mxu0 %v251
    %v357 = vpop.f32.mrb[0].mxu0
    %v358 = vadd.f32 %v273, %v357
    %v359 = vpop.f32.mrb[0].mxu0
    %v360 = vpop.f32.mrb[0].mxu0
    %v361 = vpop.f32.mrb[0].mxu0
    %362 = vdwg.mxu0
    %v363 = vxor.u32 %v358, 2147483648
    %v364 = vmul.f32 %v363, 1.442695
    %v365 = vpow.pop %v364
    %v366 = vadd.f32 %v365, 1.0
    %v367 = vrcp.pop %v366
    %v368 = vmul.f32 1.0, %v367
    %v369 = vmul.f32 %v358, %v368
    %v370 = vpack.c.bf16 %v369, %v369
    %v371 = vld [vmem:[#allocation7] sm:$0xf]
    %v372 = vld [vmem:[#allocation7 + $0x4] sm:$0xf]
    %v373 = vld [vmem:[#allocation7 + $0x8] sm:$0xf]
    %v374 = vld [vmem:[#allocation7 + $0xc] sm:$0xf]
    %v375 = vld [vmem:[#allocation7 + $0x10] sm:$0xf]
    %v376 = vld [vmem:[#allocation7 + $0x14] sm:$0xf]
    %v377 = vld [vmem:[#allocation7 + $0x18] sm:$0xf]
    %v378 = vld [vmem:[#allocation7 + $0x1c] sm:$0xf]
    %v379 = vld [vmem:[#allocation7 + $0x20] sm:$0xf]
    %v380 = vld [vmem:[#allocation7 + $0x24] sm:$0xf]
    %v381 = vld [vmem:[#allocation7 + $0x28] sm:$0xf]
    %v382 = vld [vmem:[#allocation7 + $0x2c] sm:$0xf]
    %v383 = vld [vmem:[#allocation7 + $0x30] sm:$0xf]
    %v384 = vld [vmem:[#allocation7 + $0x34] sm:$0xf]
    %v385 = vld [vmem:[#allocation7 + $0x38] sm:$0xf]
    %v386 = vld [vmem:[#allocation7 + $0x3c] sm:$0xf]
    %v387 = vld [vmem:[%s8] sm:$0x1]
    %v389 = vlaneseq
    %v390 = vshrl.u32 %v389, 7
    %v391 = vsub.s32 0, %v390
    %v392 = vrot.slane %v387, %v391
    %v410 = vunpack.c.l.b16 %v371
    %v411 = vunpack.c.l.b16 %v372
    %v412 = vunpack.c.l.b16 %v373
    %v413 = vunpack.c.l.b16 %v374
    %v414 = vunpack.c.l.b16 %v375
    %v415 = vunpack.c.l.b16 %v376
    %v416 = vunpack.c.l.b16 %v377
    %v417 = vunpack.c.l.b16 %v378
    %v418 = vunpack.c.l.b16 %v379
    %v419 = vunpack.c.l.b16 %v380
    %v420 = vunpack.c.l.b16 %v381
    %v421 = vunpack.c.l.b16 %v382
    %v422 = vunpack.c.l.b16 %v383
    %v423 = vunpack.c.l.b16 %v384
    %v424 = vunpack.c.l.b16 %v385
    %v425 = vunpack.c.l.b16 %v386
    %v426 = vpack.c.b16 %v411, %v410
    %v427 = vpack.c.b16 %v413, %v412
    %v428 = vpack.c.b16 %v415, %v414
    %v429 = vpack.c.b16 %v417, %v416
    %v430 = vpack.c.b16 %v419, %v418
    %v431 = vpack.c.b16 %v421, %v420
    %v432 = vpack.c.b16 %v423, %v422
    %v433 = vpack.c.b16 %v425, %v424
    %442 = vmatprep.subr.bf16.mxu0 0
    %443 = vmatpush1.bf16.msra.mxu0 %v426
    %444 = vmatprep.subr.bf16.mxu0 0
    %445 = vmatpush1.bf16.msra.mxu0 %v427
    %446 = vmatprep.subr.bf16.mxu0 0
    %447 = vmatpush1.bf16.msra.mxu0 %v428
    %448 = vmatprep.subr.bf16.mxu0 0
    %449 = vmatpush1.bf16.msra.mxu0 %v429
    %450 = vmatprep.subr.bf16.mxu0 0
    %451 = vmatpush1.bf16.msra.mxu0 %v430
    %452 = vmatprep.subr.bf16.mxu0 0
    %453 = vmatpush1.bf16.msra.mxu0 %v431
    %454 = vmatprep.subr.bf16.mxu0 0
    %455 = vmatpush1.bf16.msra.mxu0 %v432
    %456 = vmatprep.subr.bf16.mxu0 0
    %457 = vmatpush1.bf16.msra.mxu0 %v433
    %458 = vmatprep.subr.bf16.mxu0 0
    %459 = vmatpush1.bf16.msra.mxu0 0
    %460 = vmatprep.subr.bf16.mxu0 0
    %461 = vmatpush1.bf16.msra.mxu0 0
    %462 = vmatprep.subr.bf16.mxu0 0
    %463 = vmatpush1.bf16.msra.mxu0 0
    %464 = vmatprep.subr.bf16.mxu0 0
    %465 = vmatpush1.bf16.msra.mxu0 0
    %466 = vmatprep.subr.bf16.mxu0 0
    %467 = vmatpush1.bf16.msra.mxu0 0
    %468 = vmatprep.subr.bf16.mxu0 0
    %469 = vmatpush1.bf16.msra.mxu0 0
    %470 = vmatprep.subr.bf16.mxu0 0
    %471 = vmatpush1.bf16.msra.mxu0 0
    %472 = vmatprep.subr.bf16.mxu0 0
    %473 = vmatpush1.bf16.msra.mxu0 0
    %474 = vmatprep.mubr.bf16.mxu0 0
    %475 = vmatmul.mubr.bf16.gmra.mrb[0].mxu0 %v370
    %v476 = vpop.f32.mrb[0].mxu0
    %v477 = vadd.f32 %v392, %v476
    %v478 = vpop.f32.mrb[0].mxu0
    %v479 = vpop.f32.mrb[0].mxu0
    %v480 = vpop.f32.mrb[0].mxu0
    %481 = vdwg.mxu0
    %v482 = vxor.u32 %v477, 2147483648
    %v483 = vmul.f32 %v482, 1.442695
    %v484 = vpow.pop %v483
    %v485 = vadd.f32 %v484, 1.0
    %v486 = vrcp.pop %v485
    %v487 = vmul.f32 1.0, %v486
    %v488 = vmul.f32 %v477, %v487
    %489 = vst [vmem:[#allocation8] sm:$0xff] %v488
    // Predicated region
    $region50: #{tpu_custom_call.1} parent=1 // pred_check
      _
    $region51: #{tpu_custom_call.1} parent=1 // pred_check_branch
      %491 = sbr.rel (0) target = $region53
    $region52: #{tpu_custom_call.1} parent=1 // pred_region
      %s493 = ssub.s32 128, 128
      %494 = vsyncadd [#allocation4], %s493
      %s496 = sshll.u32 [#allocation8], 4
      %s497 = int_to_ptr.vmem [resolvable:$true] %s496
      %499 = dma.vmem_to_hbm [thread:$0]  %s497, 128, %s9, [#allocation4]
    $region53: #{tpu_custom_call.1} parent=1 // pred_fallthru
      _
    // Predicated region
    $region54: #{tpu_custom_call.1} parent=1 // pred_check
      _
    $region55: #{tpu_custom_call.1} parent=1 // pred_check_branch
      %501 = sbr.rel (0) target = $region57
    $region56: #{tpu_custom_call.1} parent=1 // pred_region
      %502 = dma.done [#allocation4], 128
    $region57: #{tpu_custom_call.1} parent=1 // pred_fallthru
      _
    %503 = vsyncpa [#allocation3], 1
    %504 = vsyncpa [#allocation6], 1
    %505 = vsyncpa [#allocation4], 1

</llo_original>
